<compile_context>
chip_gen: v6e
topology: v6e:2x2x1
jax: 0.10.0
libtpu: 0.0.40
codegen_flags: <defaults>
</compile_context>

<pallas_src>
import functools
import math

import jax
import jax.numpy as jnp
from jax.experimental import pallas as pl
from jax.experimental.pallas import tpu as pltpu


def _layernorm_kernel(x_ref, alpha_ref, bias_ref, o_ref, *, eps: float, d: int):
    """One (TR, D) row block of LayerNorm.  alpha/bias are SMEM scalars."""
    x = x_ref[...].astype(jnp.float32)
    mean = jnp.mean(x, axis=-1, keepdims=True)
    xc = x - mean
    inv_nm1 = 1.0 / float(max(d - 1, 1))            # torch .std => unbiased (N-1)
    var = jnp.sum(xc * xc, axis=-1, keepdims=True) * inv_nm1
    std = jnp.sqrt(var)
    alpha = alpha_ref[0]
    bias = bias_ref[0]
    # Fold alpha into a per-row (TR, 1) scale.  Exact divide (not approx reciprocal)
    # to stay within the 1e-5 self-test tolerance; it is a (TR, 1) op, so cheap.
    scale = alpha / (std + eps)
    o_ref[...] = (xc * scale + bias).astype(o_ref.dtype)


@functools.lru_cache(maxsize=1)
def _vmem_capacity_bytes() -> int:
    """Physical VMEM per TensorCore; conservative fallback if the query fails."""
    try:
        info = pltpu.get_tpu_info()
        cap = int(getattr(info, "vmem_capacity_bytes", 0))
        if cap > 0:
            return cap
    except Exception:
        pass
    return 64 << 20  # v7x per-TC size: the smallest across v5e/v6e/v7x


def _pick_row_tile(n_rows: int, d: int, itemsize: int, target_bytes: int) -> int:
    """Largest sublane-aligned (multiple-of-8) row tile up to ~target_bytes.

    The grid uses pl.cdiv, so the tile does NOT need to divide n_rows; Pallas masks
    the ragged last block (LN is row-wise, so padded tail rows cannot contaminate
    valid rows and their stores are dropped).
    """
    bytes_per_row = max(1, itemsize * max(d, 1))
    rows = max(8, target_bytes // bytes_per_row)
    rows = (rows // 8) * 8
    if n_rows >= 8:
        rows = min(rows, (n_rows // 8) * 8)
    else:
        rows = n_rows  # block equal to the full array dim is always legal
    return int(max(rows, 1))


@functools.partial(jax.jit, static_argnames=("eps",))
def layer_norm_forward(x, alpha, bias, *, eps: float = 1e-6):
    """LayerNormalization.forward: normalize over the last dim, scalar affine params."""
    orig_shape = x.shape
    d = int(orig_shape[-1])
    n_rows = int(math.prod(orig_shape[:-1])) if len(orig_shape) > 1 else 1
    x2 = x.reshape(n_rows, d)
    alpha1 = alpha.reshape(1).astype(jnp.float32)
    bias1 = bias.reshape(1).astype(jnp.float32)

    # Per-generation sizing: tile <= cap/16 (<= 8 MiB); vmem limit <= 3/4 cap (<= 96 MiB).
    # v7x (64 MiB VMEM): 4 MiB tile / 48 MiB limit.  v5e/v6e (128 MiB): 8 MiB / 96 MiB.
    cap = _vmem_capacity_bytes()
    target_tile_bytes = int(min(8 << 20, cap // 16))
    vmem_limit = int(min(cap * 3 // 4, 96 << 20))

    tr = _pick_row_tile(n_rows, d, x.dtype.itemsize, target_tile_bytes)
    grid = (pl.cdiv(n_rows, tr),)

    # TODO(synk): for D < 128 the output last dim under-fills the 128-lane vregs
    # (masked vst); packing k=128//D rows per lane-row would recover store bandwidth
    # but requires segmented in-kernel reductions.

    kernel = functools.partial(_layernorm_kernel, eps=float(eps), d=d)

    out = pl.pallas_call(
        kernel,
        out_shape=jax.ShapeDtypeStruct((n_rows, d), x.dtype),
        grid=grid,
        in_specs=[
            pl.BlockSpec((tr, d), lambda i: (i, 0)),                    # activation rows
            pl.BlockSpec(memory_space=pltpu.MemorySpace.SMEM),          # alpha scalar
            pl.BlockSpec(memory_space=pltpu.MemorySpace.SMEM),          # bias scalar
        ],
        out_specs=pl.BlockSpec((tr, d), lambda i: (i, 0)),
        compiler_params=pltpu.CompilerParams(
            dimension_semantics=("parallel",),   # shard the row axis across TCs on v7x
            vmem_limit_bytes=vmem_limit,
        ),
    )(x2, alpha1, bias1)
    return out.reshape(orig_shape)


def encoder_forward(x, mask, alpha, bias, *, layers=(), eps: float = 1e-6):
    """Encoder.forward: apply the (opaque) layers, then the Pallas LayerNormalization."""
    # TODO(synk): the Encoder's nn.ModuleList layers have no definition in the spec;
    # any provided JAX callables are applied here as-is (mask is only consumed by them).
    for layer in layers:
        x = layer(x, mask)
    return layer_norm_forward(x, alpha, bias, eps=eps)


def _reference_layernorm(x, alpha, bias, eps):
    mean = jnp.mean(x, axis=-1, keepdims=True)
    std = jnp.std(x, axis=-1, keepdims=True, ddof=1)   # torch .std => unbiased
    return alpha[0] * (x - mean) / (std + eps) + bias[0]


if __name__ == "__main__":
    eps = 1e-6
    key = jax.random.PRNGKey(0)

    # LayerNormalization parameters: alpha = ones(1), bias = zeros(1) (as in __init__).
    alpha = jnp.ones((1,), dtype=jnp.float32)
    bias = jnp.zeros((1,), dtype=jnp.float32)
    mask = None  # only consumed by the opaque encoder layers; unused by the final norm

    # Test 1: small shape consistent with the module (batch=2, seq=8, d_model=32).
    k1, k2 = jax.random.split(key)
    x1 = jax.random.normal(k1, (2, 8, 32), dtype=jnp.float32)
    ref1 = _reference_layernorm(x1, alpha, bias, eps)
    out1 = jax.block_until_ready(encoder_forward(x1, mask, alpha, bias, eps=eps))
    assert out1.shape == x1.shape
    assert jnp.allclose(out1, ref1, atol=1e-5, rtol=1e-5), "LayerNorm mismatch (test 1)"

    # Test 2: ragged row count (3*7=21 rows) to exercise the cdiv grid / masked tail block.
    x2 = jax.random.normal(k2, (3, 7, 128), dtype=jnp.float32)
    ref2 = _reference_layernorm(x2, alpha, bias, eps)
    out2 = jax.block_until_ready(encoder_forward(x2, mask, alpha, bias, eps=eps))
    assert out2.shape == x2.shape
    assert jnp.allclose(out2, ref2, atol=1e-5, rtol=1e-5), "LayerNorm mismatch (test 2)"

    print("KERNEL_OK")
</pallas_src>

<mosaic_0001>
module attributes {stable_mosaic.version = 11 : i64} {
  func.func @_layernorm_kernel(%arg0: i32, %arg1: memref<16x32xf32, #tpu.memory_space<vmem>>, %arg2: memref<1xf32, #tpu.memory_space<smem>>, %arg3: memref<1xf32, #tpu.memory_space<smem>>, %arg4: memref<16x32xf32, #tpu.memory_space<vmem>>) attributes {dimension_semantics = [#tpu.dimension_semantics<parallel>], iteration_bounds = array<i64: 1>, scalar_prefetch = 0 : i64, scratch_operands = 0 : i64, tpu.core_type = #tpu.core_type<tc>, window_params = [{transform_indices = @transform_0, window_bounds = array<i64: 16, 32>}, {transform_indices = @transform_1, window_bounds = array<i64: 1>}, {transform_indices = @transform_2, window_bounds = array<i64: 1>}, {transform_indices = @transform_3, window_bounds = array<i64: 16, 32>}]} {
    %c0 = arith.constant 0 : index
    %c0_0 = arith.constant 0 : index
    %0 = vector.load %arg1[%c0, %c0_0] : memref<16x32xf32, #tpu.memory_space<vmem>>, vector<16x32xf32>
    %cst = arith.constant dense<0.000000e+00> : vector<16xf32>
    %1 = vector.multi_reduction <add>, %0, %cst [1] : vector<16x32xf32> to vector<16xf32>
    %2 = vector.shape_cast %1 : vector<16xf32> to vector<16x1xf32>
    %cst_1 = arith.constant 3.200000e+01 : f32
    %3 = vector.broadcast %cst_1 : f32 to vector<16x1xf32>
    %4 = arith.divf %2, %3 : vector<16x1xf32>
    %5 = vector.broadcast %4 : vector<16x1xf32> to vector<16x32xf32>
    %6 = arith.subf %0, %5 : vector<16x32xf32>
    %7 = arith.mulf %6, %6 : vector<16x32xf32>
    %cst_2 = arith.constant dense<0.000000e+00> : vector<16xf32>
    %8 = vector.multi_reduction <add>, %7, %cst_2 [1] : vector<16x32xf32> to vector<16xf32>
    %9 = vector.shape_cast %8 : vector<16xf32> to vector<16x1xf32>
    %cst_3 = arith.constant 0.0322580636 : f32
    %10 = vector.broadcast %cst_3 : f32 to vector<16x1xf32>
    %11 = arith.mulf %9, %10 : vector<16x1xf32>
    %12 = math.sqrt %11 : vector<16x1xf32>
    %c0_4 = arith.constant 0 : index
    %13 = memref.load %arg2[%c0_4] : memref<1xf32, #tpu.memory_space<smem>>
    %c0_5 = arith.constant 0 : index
    %14 = memref.load %arg3[%c0_5] : memref<1xf32, #tpu.memory_space<smem>>
    %cst_6 = arith.constant 9.99999997E-7 : f32
    %15 = vector.broadcast %cst_6 : f32 to vector<16x1xf32>
    %16 = arith.addf %12, %15 : vector<16x1xf32>
    %17 = vector.broadcast %13 : f32 to vector<16x1xf32>
    %18 = arith.divf %17, %16 : vector<16x1xf32>
    %19 = vector.broadcast %18 : vector<16x1xf32> to vector<16x32xf32>
    %20 = arith.mulf %6, %19 : vector<16x32xf32>
    %21 = vector.broadcast %14 : f32 to vector<16x32xf32>
    %22 = arith.addf %20, %21 : vector<16x32xf32>
    %c0_7 = arith.constant 0 : index
    %c0_8 = arith.constant 0 : index
    %23 = vector.load %arg4[%c0_7, %c0_8] : memref<16x32xf32, #tpu.memory_space<vmem>>, vector<16x32xf32>
    tpu.vector_store %arg4[%c0_7, %c0_8], %22 {strides = array<i32>} : memref<16x32xf32, #tpu.memory_space<vmem>>, vector<16x32xf32>,
    return
  }
  func.func @transform_0(%arg0: i32) -> (i32, i32) {
    %c0_i32 = arith.constant 0 : i32
    %c0_i32_0 = arith.constant 0 : i32
    return %arg0, %c0_i32 : i32, i32
  }
  func.func @transform_1(%arg0: i32) -> i32 {
    %c0_i32 = arith.constant 0 : i32
    %c0_i32_0 = arith.constant 0 : i32
    return %c0_i32 : i32
  }
  func.func @transform_2(%arg0: i32) -> i32 {
    %c0_i32 = arith.constant 0 : i32
    %c0_i32_0 = arith.constant 0 : i32
    return %c0_i32 : i32
  }
  func.func @transform_3(%arg0: i32) -> (i32, i32) {
    %c0_i32 = arith.constant 0 : i32
    %c0_i32_0 = arith.constant 0 : i32
    return %arg0, %c0_i32 : i32, i32
  }
}

</mosaic_0001>

<llo_original>
// kernel: layer_norm_forward.1
$region0: #{layer_norm_forward.1}
  #allocation0 [shape = 'u32[]', space=smem, size = 0x4, offset = 0x4, fixed_abs, tag = 'smem constant byte address 0x4 - core index']
  #allocation1 [shape = 'u32[144,128]{1,0:T(1,128)}', space=vmem, size = 0x12000, scoped, tag = 'internal scratch']
  #allocation2 [shape = 'f32[1]{0:T(128)S(6)}', space=smem, size = 0x200, scoped, tag = 'scoped memory for layer_norm_forward.1']
  #allocation3 [shape = 'f32[1]{0:T(128)S(6)}', space=smem, size = 0x200, scoped, tag = 'scoped memory for layer_norm_forward.1']
  %s0 = inlined_call_operand.hbm [shape: f32[16,32], index: 0, kind: input, shape index: {}]
  %s1 = inlined_call_operand.<no memory space> [shape: f32[1], index: 1, kind: input, shape index: {}]
  %s2 = inlined_call_operand.<no memory space> [shape: f32[1], index: 2, kind: input, shape index: {}]
  %s3 = inlined_call_operand.hbm [shape: f32[16,32], index: 3, kind: output, shape index: {}]
  %s4 = sld [smem:[#allocation0]]
  $region26: #{layer_norm_forward.1} parent=0
    _
  %s6 = ssub.s32 1, %s4
  %s7 = scalar_select 0, %s6, %s4
  %8 = sst [smem:[#allocation2]] %s1
  %9 = sst [smem:[#allocation3]] %s2
  $region1: #{layer_norm_forward.1} parent=0
    #allocation4 [shape = 'u8[8192]{0}', space=vmem, size = 0x2000, scoped, tag = 'input window, operand 0, single buffered']
    #allocation5 [shape = 's32[1]{0}', space=sflag, size = 0x4, scoped, tag = 'scoped memory for layer_norm_forward.1']
    #allocation6 [shape = 's32[1]{0}', space=sflag, size = 0x4, scoped, tag = 'scoped memory for layer_norm_forward.1']
    #allocation7 [shape = 'u8[8192]{0}', space=vmem, size = 0x2000, scoped, tag = 'output window, operand 0, single buffered']
    %10 = vsyncpa [#allocation5], 0
    %11 = vsyncpa [#allocation6], 0
    // Predicated region
    $region2: #{layer_norm_forward.1} parent=1 // pred_check
      _
    $region3: #{layer_norm_forward.1} parent=1 // pred_check_branch
      %13 = sbr.rel (0) target = $region5
    $region4: #{layer_norm_forward.1} parent=1 // pred_region
      %s15 = ssub.s32 256, 256
      %16 = vsyncadd [#allocation5], %s15
      %s17 = sshll.u32 [#allocation4], 4
      %s18 = int_to_ptr.vmem [resolvable:$true] %s17
      %23 = dma.hbm_to_vmem [thread:$0]  %s0, 256, %s18, [#allocation5], 128, 128, 8
    $region5: #{layer_norm_forward.1} parent=1 // pred_fallthru
      _
    // Predicated region
    $region6: #{layer_norm_forward.1} parent=1 // pred_check
      _
    $region7: #{layer_norm_forward.1} parent=1 // pred_check_branch
      %25 = sbr.rel (0) target = $region9
    $region8: #{layer_norm_forward.1} parent=1 // pred_region
      _
    $region9: #{layer_norm_forward.1} parent=1 // pred_fallthru
      _
    // Predicated region
    $region10: #{layer_norm_forward.1} parent=1 // pred_check
      _
    $region11: #{layer_norm_forward.1} parent=1 // pred_check_branch
      %27 = sbr.rel (0) target = $region13
    $region12: #{layer_norm_forward.1} parent=1 // pred_region
      _
    $region13: #{layer_norm_forward.1} parent=1 // pred_fallthru
      _
    // Predicated region
    $region14: #{layer_norm_forward.1} parent=1 // pred_check
      _
    $region15: #{layer_norm_forward.1} parent=1 // pred_check_branch
      %29 = sbr.rel (0) target = $region17
    $region16: #{layer_norm_forward.1} parent=1 // pred_region
      %30 = dma.done [#allocation5], 256
    $region17: #{layer_norm_forward.1} parent=1 // pred_fallthru
      _
    %v31 = vld [vmem:[#allocation4] sm:$0xff]
    %v32 = vld [vmem:[#allocation4 + $0x8] sm:$0xff]
    %vm33 = vcmask 261120
    %v34 = vsel %vm33, %v31, 0.0
    %35 = vadd.xlane.f32.xlu0 %v34
    %v36 = vpop.xlane.xlu0 %35
    %v37 = vsel %vm33, %v32, 0.0
    %38 = vadd.xlane.f32.xlu0 %v37
    %v39 = vpop.xlane.xlu0 %38
    %v40 = vrcp.pop 32.0
    %v41 = vmul.f32 %v36, %v40
    %v42 = vmul.f32 %v39, %v40
    %v43 = vsub.f32 %v31, %v41
    %v44 = vsub.f32 %v32, %v42
    %v45 = vmul.f32 %v43, %v43
    %v46 = vmul.f32 %v44, %v44
    %v47 = vsel %vm33, %v45, 0.0
    %48 = vadd.xlane.f32.xlu0 %v47
    %v49 = vpop.xlane.xlu0 %48
    %v50 = vsel %vm33, %v46, 0.0
    %51 = vadd.xlane.f32.xlu0 %v50
    %v52 = vpop.xlane.xlu0 %51
    %v53 = vmul.f32 %v49, 0.032258064
    %v54 = vmul.f32 %v52, 0.032258064
    %v55 = vrsqrt.pop %v53
    %v56 = vmul.f32 %v53, %v55
    %vm57 = vcmp.eq.f32.partialorder %v53, inf
    %v58 = vsel %vm57, %v53, %v56
    %vm59 = vcmp.eq.f32.partialorder %v53, 0.0
    %v60 = vand.u32 %v53, 2147483648
    %v61 = vsel %vm59, %v60, %v58
    %v62 = vrsqrt.pop %v54
    %v63 = vmul.f32 %v54, %v62
    %vm64 = vcmp.eq.f32.partialorder %v54, inf
    %v65 = vsel %vm64, %v54, %v63
    %vm66 = vcmp.eq.f32.partialorder %v54, 0.0
    %v67 = vand.u32 %v54, 2147483648
    %v68 = vsel %vm66, %v67, %v65
    %s69 = sld [smem:[#allocation2]]
    %s70 = sld [smem:[#allocation3]]
    %v71 = vadd.f32 %v61, 1e-06
    %v72 = vadd.f32 %v68, 1e-06
    %v73 = vstv %s69
    %v74 = vrcp.pop %v71
    %v75 = vmul.f32 %v73, %v74
    %v76 = vrcp.pop %v72
    %v77 = vmul.f32 %v73, %v76
    %v78 = vmul.f32 %v43, %v75
    %v79 = vmul.f32 %v44, %v77
    %v80 = vstv %s70
    %v81 = vadd.f32 %v78, %v80
    %v82 = vadd.f32 %v79, %v80
    %83 = vst.msk [vmem:[#allocation7] sm:$0xff] %vm33, %v81
    %84 = vst.msk [vmem:[#allocation7 + $0x8] sm:$0xff] %vm33, %v82
    // Predicated region
    $region18: #{layer_norm_forward.1} parent=1 // pred_check
      _
    $region19: #{layer_norm_forward.1} parent=1 // pred_check_branch
      %86 = sbr.rel (0) target = $region21
    $region20: #{layer_norm_forward.1} parent=1 // pred_region
      %s88 = ssub.s32 256, 256
      %89 = vsyncadd [#allocation6], %s88
      %s90 = sshll.u32 [#allocation7], 4
      %s91 = int_to_ptr.vmem [resolvable:$true] %s90
      %96 = dma.vmem_to_hbm [thread:$0]  %s91, 256, %s3, [#allocation6], 128, 128, 8
    $region21: #{layer_norm_forward.1} parent=1 // pred_fallthru
      _
    // Predicated region
    $region22: #{layer_norm_forward.1} parent=1 // pred_check
      _
    $region23: #{layer_norm_forward.1} parent=1 // pred_check_branch
      %98 = sbr.rel (0) target = $region25
    $region24: #{layer_norm_forward.1} parent=1 // pred_region
      %99 = dma.done [#allocation6], 256
    $region25: #{layer_norm_forward.1} parent=1 // pred_fallthru
      _
    %100 = vsyncpa [#allocation5], 1
    %101 = vsyncpa [#allocation6], 1

</llo_original>
